<compile_context>
chip_gen: v7x
topology: tpu7x:2x2x1
jax: 0.10.0
libtpu: 0.0.40
codegen_flags: <defaults>
</compile_context>

<pallas_src>
import functools
import math
from collections import namedtuple

import numpy as np
import jax
import jax.numpy as jnp
from jax import lax
from jax.experimental import pallas as pl
from jax.experimental.pallas import tpu as pltpu

ScaleShape = namedtuple("ScaleShape", ["dim", "spatial_stride"])

_VMEM_CAP = 32 * 1024 * 1024  # explicit scoped-VMEM limit (v7x-safe)


def _cp(*sem, vmem=None):
    if vmem is None:
        return pltpu.CompilerParams(dimension_semantics=tuple(sem))
    return pltpu.CompilerParams(dimension_semantics=tuple(sem), vmem_limit_bytes=vmem)


def _row_tile(M):
    return M if M <= 512 else 512


def _k_tile(K):
    if K <= 1024:
        return K
    for t in (1024, 512, 256):
        if K % t == 0:
            return t
    return K


# ----------------------------------------------------------------------------
# Pallas kernels
# ----------------------------------------------------------------------------
def _matmul_kernel(a_ref, b_ref, bias_ref, o_ref, acc_ref, *, activation):
    @pl.when(pl.program_id(1) == 0)
    def _():
        acc_ref[...] = jnp.zeros_like(acc_ref)

    acc_ref[...] += jnp.dot(a_ref[...], b_ref[...], preferred_element_type=jnp.float32)

    @pl.when(pl.program_id(1) == pl.num_programs(1) - 1)
    def _():
        acc = acc_ref[...] + bias_ref[...]
        if activation == "relu":
            acc = jnp.maximum(acc, 0.0)
        elif activation == "softplus":
            acc = jax.nn.softplus(acc)
        o_ref[...] = acc


def matmul(a, b, bias=None, activation=None):
    """(M,K)@(K,N)+bias, optional activation. bf16 operands, f32 VMEM accumulator."""
    M, K = a.shape
    K2, N = b.shape
    assert K == K2
    if bias is None:
        bias = jnp.zeros((N,), jnp.float32)
    TM = _row_tile(M)
    TK = _k_tile(K)
    return pl.pallas_call(
        functools.partial(_matmul_kernel, activation=activation),
        out_shape=jax.ShapeDtypeStruct((M, N), jnp.float32),
        grid=(pl.cdiv(M, TM), pl.cdiv(K, TK)),
        in_specs=[
            pl.BlockSpec((TM, TK), lambda i, k: (i, k)),
            pl.BlockSpec((TK, N), lambda i, k: (k, 0)),
            pl.BlockSpec((1, N), lambda i, k: (0, 0)),
        ],
        out_specs=pl.BlockSpec((TM, N), lambda i, k: (i, 0)),
        scratch_shapes=[pltpu.VMEM((TM, N), jnp.float32)],
        compiler_params=_cp("parallel", "arbitrary", vmem=_VMEM_CAP),
    )(a.astype(jnp.bfloat16), b.astype(jnp.bfloat16),
      bias.reshape(1, N).astype(jnp.float32))


def _bmm_kernel(a_ref, b_ref, o_ref):
    o_ref[...] = jnp.dot(a_ref[...], b_ref[...], preferred_element_type=jnp.float32)


def bmm(a, b):
    """Batched matmul (Bt,M,K)@(Bt,K,N), bf16 operands, f32 acc, per-batch grid."""
    Bt, M, K = a.shape
    _, K2, N = b.shape
    assert K == K2
    return pl.pallas_call(
        _bmm_kernel,
        out_shape=jax.ShapeDtypeStruct((Bt, M, N), jnp.float32),
        grid=(Bt,),
        in_specs=[
            pl.BlockSpec((None, M, K), lambda i: (i, 0, 0)),
            pl.BlockSpec((None, K, N), lambda i: (i, 0, 0)),
        ],
        out_specs=pl.BlockSpec((None, M, N), lambda i: (i, 0, 0)),
        compiler_params=_cp("parallel"),
    )(a.astype(jnp.bfloat16), b.astype(jnp.bfloat16))


def _ln_kernel(x_ref, g_ref, b_ref, o_ref, *, eps):
    x = x_ref[...].astype(jnp.float32)
    mean = jnp.mean(x, axis=-1, keepdims=True)
    var = jnp.mean((x - mean) ** 2, axis=-1, keepdims=True)
    o_ref[...] = (x - mean) * lax.rsqrt(var + eps) * g_ref[...] + b_ref[...]


def _add_ln_kernel(x_ref, r_ref, g_ref, b_ref, o_ref, *, eps):
    x = x_ref[...].astype(jnp.float32) + r_ref[...].astype(jnp.float32)
    mean = jnp.mean(x, axis=-1, keepdims=True)
    var = jnp.mean((x - mean) ** 2, axis=-1, keepdims=True)
    o_ref[...] = (x - mean) * lax.rsqrt(var + eps) * g_ref[...] + b_ref[...]


def layernorm(x2d, gamma, beta, residual=None, eps=1e-5):
    """Row-tiled LayerNorm (optionally LN(x + residual)); bf16 streamed, f32 math."""
    R, C = x2d.shape
    TR = _row_tile(R)
    g = gamma.reshape(1, C).astype(jnp.float32)
    b = beta.reshape(1, C).astype(jnp.float32)
    if residual is None:
        return pl.pallas_call(
            functools.partial(_ln_kernel, eps=eps),
            out_shape=jax.ShapeDtypeStruct((R, C), jnp.float32),
            grid=(pl.cdiv(R, TR),),
            in_specs=[
                pl.BlockSpec((TR, C), lambda i: (i, 0)),
                pl.BlockSpec((1, C), lambda i: (0, 0)),
                pl.BlockSpec((1, C), lambda i: (0, 0)),
            ],
            out_specs=pl.BlockSpec((TR, C), lambda i: (i, 0)),
            compiler_params=_cp("parallel"),
        )(x2d.astype(jnp.bfloat16), g, b)
    return pl.pallas_call(
        functools.partial(_add_ln_kernel, eps=eps),
        out_shape=jax.ShapeDtypeStruct((R, C), jnp.float32),
        grid=(pl.cdiv(R, TR),),
        in_specs=[
            pl.BlockSpec((TR, C), lambda i: (i, 0)),
            pl.BlockSpec((TR, C), lambda i: (i, 0)),
            pl.BlockSpec((1, C), lambda i: (0, 0)),
            pl.BlockSpec((1, C), lambda i: (0, 0)),
        ],
        out_specs=pl.BlockSpec((TR, C), lambda i: (i, 0)),
        compiler_params=_cp("parallel"),
    )(x2d.astype(jnp.bfloat16), residual.astype(jnp.bfloat16), g, b)


def _ffn_kernel(x_ref, w1_ref, b1_ref, w2_ref, b2_ref, g_ref, bb_ref, o_ref, *, eps):
    # FFNLayer (normalize_before=False): LN(x + linear2(relu(linear1(x))))
    xb = x_ref[...]                                                   # bf16
    h = jnp.dot(xb, w1_ref[...], preferred_element_type=jnp.float32) + b1_ref[...]
    h = jnp.maximum(h, 0.0)
    h2 = jnp.dot(h.astype(jnp.bfloat16), w2_ref[...],
                 preferred_element_type=jnp.float32) + b2_ref[...]
    r = xb.astype(jnp.float32) + h2
    mean = jnp.mean(r, axis=-1, keepdims=True)
    var = jnp.mean((r - mean) ** 2, axis=-1, keepdims=True)
    o_ref[...] = (r - mean) * lax.rsqrt(var + eps) * g_ref[...] + bb_ref[...]


def ffn_forward(x2d, p, eps=1e-5):
    M, C = x2d.shape
    dff = p["w1"].shape[1]
    TR = _row_tile(M)
    return pl.pallas_call(
        functools.partial(_ffn_kernel, eps=eps),
        out_shape=jax.ShapeDtypeStruct((M, C), jnp.float32),
        grid=(pl.cdiv(M, TR),),
        in_specs=[
            pl.BlockSpec((TR, C), lambda i: (i, 0)),
            pl.BlockSpec((C, dff), lambda i: (0, 0)),
            pl.BlockSpec((1, dff), lambda i: (0, 0)),
            pl.BlockSpec((dff, C), lambda i: (0, 0)),
            pl.BlockSpec((1, C), lambda i: (0, 0)),
            pl.BlockSpec((1, C), lambda i: (0, 0)),
            pl.BlockSpec((1, C), lambda i: (0, 0)),
        ],
        out_specs=pl.BlockSpec((TR, C), lambda i: (i, 0)),
        compiler_params=_cp("parallel"),
    )(x2d.astype(jnp.bfloat16),
      p["w1"].astype(jnp.bfloat16), p["b1"].reshape(1, dff).astype(jnp.float32),
      p["w2"].astype(jnp.bfloat16), p["b2"].reshape(1, C).astype(jnp.float32),
      p["ng"].reshape(1, C).astype(jnp.float32), p["nb"].reshape(1, C).astype(jnp.float32))


def _lin_res_ln_kernel(x_ref, w_ref, b_ref, r_ref, g_ref, bb_ref, o_ref, *, eps):
    acc = jnp.dot(x_ref[...], w_ref[...], preferred_element_type=jnp.float32) + b_ref[...]
    r = r_ref[...].astype(jnp.float32) + acc
    mean = jnp.mean(r, axis=-1, keepdims=True)
    var = jnp.mean((r - mean) ** 2, axis=-1, keepdims=True)
    o_ref[...] = (r - mean) * lax.rsqrt(var + eps) * g_ref[...] + bb_ref[...]


def linear_residual_ln(x2d, w, b, res2d, gamma, beta, eps=1e-5):
    """LN(res + x @ w + b): attention out-projection + residual + post-norm fused."""
    M, K = x2d.shape
    N = w.shape[1]
    TR = _row_tile(M)
    return pl.pallas_call(
        functools.partial(_lin_res_ln_kernel, eps=eps),
        out_shape=jax.ShapeDtypeStruct((M, N), jnp.float32),
        grid=(pl.cdiv(M, TR),),
        in_specs=[
            pl.BlockSpec((TR, K), lambda i: (i, 0)),
            pl.BlockSpec((K, N), lambda i: (0, 0)),
            pl.BlockSpec((1, N), lambda i: (0, 0)),
            pl.BlockSpec((TR, N), lambda i: (i, 0)),
            pl.BlockSpec((1, N), lambda i: (0, 0)),
            pl.BlockSpec((1, N), lambda i: (0, 0)),
        ],
        out_specs=pl.BlockSpec((TR, N), lambda i: (i, 0)),
        compiler_params=_cp("parallel"),
    )(x2d.astype(jnp.bfloat16), w.astype(jnp.bfloat16),
      b.reshape(1, N).astype(jnp.float32), res2d.astype(jnp.bfloat16),
      gamma.reshape(1, N).astype(jnp.float32), beta.reshape(1, N).astype(jnp.float32))


def _mha_kernel(q_ref, k_ref, v_ref, o_ref, *, nheads, scale):
    # All heads in one kernel; C stays on lanes (lane-dense output store).
    q = q_ref[...]
    k = k_ref[...]
    v = v_ref[...]
    C = q.shape[-1]
    Dh = C // nheads
    outs = []
    for h in range(nheads):
        sl = slice(h * Dh, (h + 1) * Dh)
        s = jnp.einsum("bqd,bkd->bqk", q[..., sl], k[..., sl],
                       preferred_element_type=jnp.float32) * scale
        m = jnp.max(s, axis=-1, keepdims=True)
        e = jnp.exp(s - m)
        p = e / jnp.sum(e, axis=-1, keepdims=True)
        outs.append(jnp.einsum("bqk,bkd->bqd", p.astype(jnp.bfloat16), v[..., sl],
                               preferred_element_type=jnp.float32))
    o_ref[...] = jnp.concatenate(outs, axis=-1)


def mha(q_bnc, k_bnc, v_bnc, nheads, scale):
    """Fused multi-head attention core: per B-chunk grid, all heads inside."""
    B, Nq, C = q_bnc.shape
    BC = min(B, 8)
    return pl.pallas_call(
        functools.partial(_mha_kernel, nheads=nheads, scale=scale),
        out_shape=jax.ShapeDtypeStruct((B, Nq, C), jnp.float32),
        grid=(pl.cdiv(B, BC),),
        in_specs=[
            pl.BlockSpec((BC, Nq, C), lambda i: (i, 0, 0)),
            pl.BlockSpec((BC, Nq, C), lambda i: (i, 0, 0)),
            pl.BlockSpec((BC, Nq, C), lambda i: (i, 0, 0)),
        ],
        out_specs=pl.BlockSpec((BC, Nq, C), lambda i: (i, 0, 0)),
        compiler_params=_cp("parallel"),
    )(q_bnc.astype(jnp.bfloat16), k_bnc.astype(jnp.bfloat16), v_bnc.astype(jnp.bfloat16))


def _dwconv3d_kernel(xp_ref, w_ref, b_ref, o_ref, *, k, T, H, W):
    # channels-last depthwise conv3d; C on lanes; bf16 streamed, f32 accumulate.
    acc = jnp.zeros(o_ref.shape, jnp.float32)  # (T, H, W, C)
    j = 0
    for kt in range(k):
        for kh in range(k):
            for kw in range(k):
                wv = w_ref[j:j + 1, :]                                  # (1, C) f32
                xs = xp_ref[kt:kt + T, kh:kh + H, kw:kw + W, :].astype(jnp.float32)
                acc = acc + wv[None, None, :, :] * xs
                j += 1
    o_ref[...] = acc + b_ref[...][None, None, :, :]


def dwconv3d(x, w, b, k):
    """Depthwise Conv3d (groups=C), kernel k, 'same' padding. x: (B,C,T,H,W)."""
    B, C, T, H, W = x.shape
    p = (k - 1) // 2
    xl = x.transpose(0, 2, 3, 4, 1)                                     # (B,T,H,W,C)
    xp = jnp.pad(xl, ((0, 0), (p, p), (p, p), (p, p), (0, 0)))
    Tp, Hp, Wp = T + 2 * p, H + 2 * p, W + 2 * p
    out = pl.pallas_call(
        functools.partial(_dwconv3d_kernel, k=k, T=T, H=H, W=W),
        out_shape=jax.ShapeDtypeStruct((B, T, H, W, C), jnp.float32),
        grid=(B,),
        in_specs=[
            pl.BlockSpec((None, Tp, Hp, Wp, C), lambda i: (i, 0, 0, 0, 0)),
            pl.BlockSpec((k * k * k, C), lambda i: (0, 0)),
            pl.BlockSpec((1, C), lambda i: (0, 0)),
        ],
        out_specs=pl.BlockSpec((None, T, H, W, C), lambda i: (i, 0, 0, 0, 0)),
        compiler_params=_cp("parallel", vmem=_VMEM_CAP),
    )(xp.astype(jnp.bfloat16), w.T.astype(jnp.float32), b.reshape(1, C).astype(jnp.float32))
    return out.transpose(0, 4, 1, 2, 3)


def _dwconv1d_kernel(xp_ref, w_ref, b_ref, o_ref, *, k, L):
    acc = jnp.zeros(o_ref.shape, jnp.float32)                           # (BPC, C, L)
    for j in range(k):
        acc = acc + w_ref[:, j:j + 1][None, :, :] * xp_ref[:, :, j:j + L].astype(jnp.float32)
    acc = acc + b_ref[...][None, :, :]
    o_ref[...] = acc * jax.nn.sigmoid(acc)     # SiLU (f32 on VPU/EUP)


def dwconv1d_silu(xp, w, b, k, L):
    Bp, C, Lp = xp.shape
    BPC = min(Bp, 16)
    return pl.pallas_call(
        functools.partial(_dwconv1d_kernel, k=k, L=L),
        out_shape=jax.ShapeDtypeStruct((Bp, C, L), jnp.float32),
        grid=(pl.cdiv(Bp, BPC),),
        in_specs=[
            pl.BlockSpec((BPC, C, Lp), lambda i: (i, 0, 0)),
            pl.BlockSpec((C, k), lambda i: (0, 0)),
            pl.BlockSpec((C, 1), lambda i: (0, 0)),
        ],
        out_specs=pl.BlockSpec((BPC, C, L), lambda i: (i, 0, 0)),
        compiler_params=_cp("parallel"),
    )(xp.astype(jnp.bfloat16), w.astype(jnp.float32), b.reshape(C, 1).astype(jnp.float32))


def _s6_proj_kernel(x_ref, wx_ref, wdt_ref, bdt_ref, dt_ref, dbl_ref, *, R):
    x = x_ref[...]
    dbl = jnp.dot(x, wx_ref[...], preferred_element_type=jnp.float32)   # (TR, R+2S)
    dt = jnp.dot(dbl[:, :R].astype(jnp.bfloat16), wdt_ref[...],
                 preferred_element_type=jnp.float32) + bdt_ref[...]
    dt_ref[...] = jax.nn.softplus(dt)
    dbl_ref[...] = dbl                          # single lane-contiguous store; split in JAX


def s6_projections(xt, wx, wdt, bdt, R):
    """Fused x_proj and dt_proj+softplus; returns (dt (M,C), dbl (M,R+2S))."""
    M, C = xt.shape
    N1 = wx.shape[1]
    TR = _row_tile(M)
    return pl.pallas_call(
        functools.partial(_s6_proj_kernel, R=R),
        out_shape=(jax.ShapeDtypeStruct((M, C), jnp.float32),
                   jax.ShapeDtypeStruct((M, N1), jnp.float32)),
        grid=(pl.cdiv(M, TR),),
        in_specs=[
            pl.BlockSpec((TR, C), lambda i: (i, 0)),
            pl.BlockSpec((C, N1), lambda i: (0, 0)),
            pl.BlockSpec((R, C), lambda i: (0, 0)),
            pl.BlockSpec((1, C), lambda i: (0, 0)),
        ],
        out_specs=(pl.BlockSpec((TR, C), lambda i: (i, 0)),
                   pl.BlockSpec((TR, N1), lambda i: (i, 0))),
        compiler_params=_cp("parallel"),
    )(xt.astype(jnp.bfloat16), wx.astype(jnp.bfloat16),
      wdt.astype(jnp.bfloat16), bdt.reshape(1, C).astype(jnp.float32))


def _s6_scan_kernel(x_ref, dt_ref, b_ref, c_ref, a_ref, d_ref, o_ref,
                    dA_ref, dbx_ref, *, L, BPC, S, Cdim):
    A = a_ref[...]          # (S, C)
    D = d_ref[...]          # (1, C)
    # Hoist all L-parallel work (exp, dt*x*B) off the serial recurrence chain.
    dt_all = dt_ref[...]                                               # (L, BPC, C)
    x_all = x_ref[...]                                                 # (L, BPC, C)
    dA_ref[...] = jnp.exp(dt_all[:, :, None, :] * A[None, None, :, :])  # (L,BPC,S,C)
    dbx_ref[...] = (dt_all * x_all)[:, :, None, :] * b_ref[...][:, :, :, None]

    def body(l, h):         # h: (BPC, S, C) state, C on lanes
        h = dA_ref[l] * h + dbx_ref[l]
        y = jnp.sum(h * c_ref[l][:, :, None], axis=1) + D * x_ref[l]   # (BPC, C)
        o_ref[l] = y
        return h

    h0 = jnp.zeros((BPC, S, Cdim), jnp.float32)
    lax.fori_loop(0, L, body, h0, unroll=4)


def s6_scan(xL, dt, Bm, Cm, A, D, bp_chunk=8):
    """Selective scan: grid over the parallel Bp axis, serial L recurrence in-kernel."""
    L, Bp, C = xL.shape
    S = A.shape[0]
    BPC = min(bp_chunk, Bp)
    return pl.pallas_call(
        functools.partial(_s6_scan_kernel, L=L, BPC=BPC, S=S, Cdim=C),
        out_shape=jax.ShapeDtypeStruct((L, Bp, C), jnp.float32),
        grid=(pl.cdiv(Bp, BPC),),
        in_specs=[
            pl.BlockSpec((L, BPC, C), lambda i: (0, i, 0)),
            pl.BlockSpec((L, BPC, C), lambda i: (0, i, 0)),
            pl.BlockSpec((L, BPC, S), lambda i: (0, i, 0)),
            pl.BlockSpec((L, BPC, S), lambda i: (0, i, 0)),
            pl.BlockSpec((S, C), lambda i: (0, 0)),
            pl.BlockSpec((1, C), lambda i: (0, 0)),
        ],
        out_specs=pl.BlockSpec((L, BPC, C), lambda i: (0, i, 0)),
        scratch_shapes=[pltpu.VMEM((L, BPC, S, C), jnp.float32),
                        pltpu.VMEM((L, BPC, S, C), jnp.float32)],
        compiler_params=_cp("parallel", vmem=_VMEM_CAP),
    )(xL.astype(jnp.float32), dt.astype(jnp.float32), Bm.astype(jnp.float32),
      Cm.astype(jnp.float32), A.astype(jnp.float32), D.astype(jnp.float32))


def _conv3x3_kernel(xp_ref, w_ref, b_ref, o_ref, *, H, W):
    Cout = o_ref.shape[-1]
    # In-kernel im2col: concat 9 shifted windows along K, ONE long-K MXU matmul.
    taps = []
    for j in range(9):
        kh, kw = divmod(j, 3)
        taps.append(xp_ref[kh:kh + H, kw:kw + W, :])
    xcat = jnp.concatenate(taps, axis=-1)                               # (H, W, 9*Cin)
    xcat = xcat.reshape(H * W, xcat.shape[-1])
    acc = jnp.dot(xcat, w_ref[...], preferred_element_type=jnp.float32)
    acc = jnp.maximum(acc + b_ref[...], 0.0)
    o_ref[...] = acc.reshape(H, W, Cout)


def conv3x3_relu(x_cl, w, b):
    """3x3 conv (pad=1) + ReLU, channels-last; single (H*W, 9*Cin)@(9*Cin,Cout) matmul."""
    N, H, W, Cin = x_cl.shape
    Cout = w.shape[-1]
    xp = jnp.pad(x_cl, ((0, 0), (1, 1), (1, 1), (0, 0)))
    return pl.pallas_call(
        functools.partial(_conv3x3_kernel, H=H, W=W),
        out_shape=jax.ShapeDtypeStruct((N, H, W, Cout), jnp.float32),
        grid=(N,),
        in_specs=[
            pl.BlockSpec((None, H + 2, W + 2, Cin), lambda i: (i, 0, 0, 0)),
            pl.BlockSpec((9 * Cin, Cout), lambda i: (0, 0)),
            pl.BlockSpec((1, Cout), lambda i: (0, 0)),
        ],
        out_specs=pl.BlockSpec((None, H, W, Cout), lambda i: (i, 0, 0, 0)),
        compiler_params=_cp("parallel", vmem=_VMEM_CAP),
    )(xp.astype(jnp.bfloat16), w.astype(jnp.bfloat16),
      b.reshape(1, Cout).astype(jnp.float32))


# ----------------------------------------------------------------------------
# Composite blocks
# ----------------------------------------------------------------------------
def self_attn_forward(q_bnc, p, nheads):
    # SelfAttentionLayer (post-norm, no query_pos, dropout=0)
    B, Nq, C = q_bnc.shape
    Dh = C // nheads
    x2d = q_bnc.reshape(B * Nq, C)
    qkv = matmul(x2d, p["in_w"], p["in_b"])
    q, k, v = jnp.split(qkv, 3, axis=-1)
    out = mha(q.reshape(B, Nq, C), k.reshape(B, Nq, C), v.reshape(B, Nq, C),
              nheads, 1.0 / math.sqrt(Dh))
    y = linear_residual_ln(out.reshape(B * Nq, C), p["out_w"], p["out_b"],
                           x2d, p["ng"], p["nb"])
    return y.reshape(B, Nq, C)


def feat_scan_forward(x, lp, qs):
    # TODO(synk): Simplify_S6_ScanFeat definition not provided; implemented as a
    # simplified Mamba S6 block (depthwise conv1d + SiLU + selective scan).
    Bp, C, L = x.shape
    k, S, R = qs["d_conv"], qs["d_state"], qs["dt_rank"]
    p = (k - 1) // 2
    xp = jnp.pad(x, ((0, 0), (0, 0), (p, p)))
    xc = dwconv1d_silu(xp, lp["s6_conv_w"], lp["s6_conv_b"], k, L)       # (Bp,C,L)
    xt = xc.transpose(0, 2, 1).reshape(Bp * L, C)
    dt2d, dbl2d = s6_projections(xt, lp["s6_xproj_w"], lp["s6_dtproj_w"],
                                 lp["s6_dtproj_b"], R)
    Bm2d = dbl2d[:, R:R + S]
    Cm2d = dbl2d[:, R + S:R + 2 * S]
    dt = dt2d.reshape(Bp, L, C).transpose(1, 0, 2)                        # (L,Bp,C)
    Bm = Bm2d.reshape(Bp, L, S).transpose(1, 0, 2)                        # (L,Bp,S)
    Cm = Cm2d.reshape(Bp, L, S).transpose(1, 0, 2)
    xL = xc.transpose(2, 0, 1)                                            # (L,Bp,C)
    A = (-jnp.exp(lp["s6_A_log"])).T                                      # (S,C)
    D = lp["s6_D"].reshape(1, C)
    y = s6_scan(xL, dt, Bm, Cm, A, D)                                     # (L,Bp,C)
    return y.transpose(1, 2, 0)                                           # (Bp,C,L)


def sine_pos_3d(B, T, C, H, W):
    # TODO(synk): build_position_encoding('3d') definition not provided; using a
    # standard 3D sine embedding. Returns (B,C,T,H,W).
    ct = (C // 3) // 2 * 2
    ch = ct
    cw = C - ct - ch

    def enc(n_pos, n_ch):
        pos = jnp.arange(n_pos, dtype=jnp.float32)
        dim_t = 10000.0 ** (2.0 * (jnp.arange(n_ch, dtype=jnp.float32) // 2) / n_ch)
        ang = pos[:, None] / dim_t[None, :]
        return jnp.where(jnp.arange(n_ch)[None, :] % 2 == 0, jnp.sin(ang), jnp.cos(ang))

    et, eh, ew = enc(T, ct), enc(H, ch), enc(W, cw)
    pt = jnp.broadcast_to(et[None, :, None, None, :], (B, T, H, W, ct))
    ph = jnp.broadcast_to(eh[None, None, :, None, :], (B, T, H, W, ch))
    pw = jnp.broadcast_to(ew[None, None, None, :, :], (B, T, H, W, cw))
    pos = jnp.concatenate([pt, ph, pw], axis=-1)
    return pos.transpose(0, 4, 1, 2, 3)


# ----------------------------------------------------------------------------
# QueryScanEncoderLayer / QueryScanEncoder / top level forward
# ----------------------------------------------------------------------------
def encoder_layer_forward(srcs, scan_queries, lp, qs):
    B, C, T = srcs[0].shape[0], srcs[0].shape[1], srcs[0].shape[2]
    Nq = scan_queries.shape[1]
    scale_shapes = [(s.shape[3], s.shape[4]) for s in srcs]
    topk_each = [int(math.floor(qs["scan_topk"] * h * w)) for h, w in scale_shapes]

    ori_src_flatten = jnp.concatenate(
        [s.transpose(0, 2, 3, 4, 1).reshape(B * T, -1, C) for s in srcs], axis=1)

    qn = layernorm(scan_queries.reshape(B * Nq, C),
                   lp["query_norm_g"], lp["query_norm_b"]).reshape(B, Nq, C)

    # query masks: one bmm over all scales concatenated along the flattened axis
    src_cat = jnp.concatenate([s.reshape(B, C, -1) for s in srcs], axis=-1)
    qm_all = bmm(qn, src_cat)                                            # (B,Nq,sum THW)
    query_masks = []
    off = 0
    for (H, W) in scale_shapes:
        n = T * H * W
        query_masks.append(qm_all[:, :, off:off + n].reshape(B, Nq, T, H, W))
        off += n

    scan_idxs = []
    for qm, k in zip(query_masks, topk_each):
        flat = qm.reshape(B, Nq, T, -1)
        # TODO(synk): top-k selection has no clean Pallas equivalent; JAX glue.
        _, idx = jax.lax.top_k(flat, k)
        if qs["topk_sorted"]:
            idx = idx[..., ::-1]
        scan_idxs.append(idx)

    srcs = [dwconv3d(s, lp["value_proj_w"], lp["value_proj_b"], qs["value_d_conv"]) for s in srcs]

    qtok = jnp.broadcast_to(scan_queries[:, :, None, None, :], (B, Nq, T, 1, C))
    scan_feats_list = []
    for idx, s, (H, W) in zip(scan_idxs, srcs, scale_shapes):
        src_bnt = jnp.broadcast_to(
            s.reshape(B, 1, C, T, H * W).transpose(0, 1, 3, 4, 2), (B, Nq, T, H * W, C))
        idx_full = jnp.broadcast_to(idx[..., None], idx.shape + (C,))
        g = jnp.take_along_axis(src_bnt, idx_full, axis=3)
        scan_feats_list.append(jnp.concatenate([g, qtok], axis=3))
    scan_feats = jnp.concatenate(scan_feats_list, axis=3)
    scale_token_sum = scan_feats.shape[3]
    scan_feats = jnp.concatenate([scan_feats, qtok], axis=3)
    Ltok = scale_token_sum + 1

    seq = scan_feats.transpose(0, 1, 4, 2, 3).reshape(B * Nq, C, T * Ltok)
    seq = feat_scan_forward(seq, lp, qs).reshape(B, Nq, C, T, Ltok)

    temporal_summ = seq[..., -1]
    body = seq[..., :-1]
    scale_splits = [v for pair in zip(topk_each, [1] * len(topk_each)) for v in pair]
    assert sum(scale_splits) == body.shape[-1]
    cuts = [int(v) for v in np.cumsum(scale_splits)[:-1]]
    parts = jnp.split(body, cuts, axis=-1)
    multiscale_summ = jnp.concatenate(parts[1::2], axis=-1)
    scale_feats = parts[0::2]

    scan_queries = scan_queries + temporal_summ.mean(-1) + multiscale_summ.mean((-2, -1))

    new_srcs = []
    for l, (idx, qsf) in enumerate(zip(scan_idxs, scale_feats)):
        H, W = scale_shapes[l]
        HW = H * W
        # real scatter-add (duplicates across queries accumulate, which also folds the
        # sum over Nq). JAX glue (XLA scatter).
        vals = qsf.transpose(0, 1, 3, 4, 2)                              # (B,Nq,T,K,C)
        scat = jnp.zeros((B, T, HW, C), jnp.float32).at[
            jnp.arange(B)[:, None, None, None],
            jnp.arange(T)[None, None, :, None],
            idx].add(vals)                                               # (B,T,HW,C)
        sum_feats = scat.reshape(B, T, H, W, C).transpose(0, 4, 1, 2, 3)
        new_srcs.append(srcs[l] + sum_feats)
    srcs = new_srcs

    src_flatten = jnp.concatenate(
        [s.transpose(0, 2, 3, 4, 1).reshape(B * T, -1, C) for s in srcs], axis=1)
    Ltot = src_flatten.shape[1]
    # residual add + norm1 fused (dropout = 0)
    sf2 = layernorm(src_flatten.reshape(-1, C), lp["norm1_g"], lp["norm1_b"],
                    residual=ori_src_flatten.reshape(-1, C))
    sf2 = ffn_forward(sf2, lp["feat_ffn"])
    src_flatten = sf2.reshape(B * T, Ltot, C)

    out_srcs = []
    offset = 0
    for (H, W) in scale_shapes:
        chunk = src_flatten[:, offset:offset + H * W, :]
        offset += H * W
        out_srcs.append(chunk.reshape(B, T, H, W, C).transpose(0, 4, 1, 2, 3))

    scan_queries = self_attn_forward(scan_queries, lp["attn"], qs["attn"]["nheads"])
    scan_queries = ffn_forward(scan_queries.reshape(B * Nq, C),
                               lp["query_ffn"]).reshape(B, Nq, C)
    return out_srcs, scan_queries, query_masks


def encoder_forward(srcs, pos_embeds, params, cfg):
    B = srcs[0].shape[0]
    qs = cfg["layer_configs"]["qs_configs"]
    Nq = qs["n_scan_queries"]
    d = cfg["d_model"]
    scan_queries = jnp.broadcast_to(params["scan_queries"][None], (B, Nq, d))
    scan_poses = jnp.broadcast_to(params["scan_poses"][None], (B, Nq, d))
    pos_embeds = [p + params["level_embed"][i].reshape(1, -1, 1, 1, 1)
                  for i, p in enumerate(pos_embeds)]
    all_masks = []
    for lp in params["layers"]:
        srcs = [s + p for s, p in zip(srcs, pos_embeds)]
        scan_queries = scan_queries + scan_poses
        srcs, scan_queries, qmasks = encoder_layer_forward(srcs, scan_queries, lp, qs)
        all_masks.append(qmasks)
    return list(srcs), all_masks


def model_forward(multiscales, params, cfg, multiscale_shapes):
    names_sorted = sorted(multiscale_shapes, key=lambda k: multiscale_shapes[k].spatial_stride)
    encoded = sorted(cfg["encoded_scales"], key=lambda k: multiscale_shapes[k].spatial_stride)
    d = cfg["d_model"]
    some = multiscales[names_sorted[0]]
    B, T = some.shape[0], some.shape[2]

    # video_projs: 1x1x1 conv to d_model for encoded scales
    # TODO(synk): exact video_projs architecture is registry-defined and not provided.
    ms = dict(multiscales)
    for name in encoded:
        x = ms[name]
        Bx, Cin, Tx, H, W = x.shape
        xf = x.transpose(0, 2, 3, 4, 1).reshape(-1, Cin)
        y = matmul(xf, params[f"proj_w_{name}"], params[f"proj_b_{name}"])
        ms[name] = y.reshape(Bx, Tx, H, W, d).transpose(0, 4, 1, 2, 3)

    srcs, poses = [], []
    for name in encoded[::-1]:
        x = ms[name]
        srcs.append(x)
        poses.append(sine_pos_3d(B, T, d, x.shape[3], x.shape[4]))

    memory_features, all_masks = encoder_forward(srcs, poses, params, cfg)

    num_fpn = int(np.log2(multiscale_shapes[encoded[0]].spatial_stride)
                  - np.log2(multiscale_shapes[names_sorted[0]].spatial_stride))
    fpn_names = names_sorted[:num_fpn][::-1]
    for idx, f in enumerate(fpn_names):
        x = ms[f]                                       # (B, Cin, T, H, W) original dims
        Bx, Cin, Tx, H, W = x.shape
        xf = x.transpose(0, 2, 3, 4, 1).reshape(-1, Cin)
        cur = matmul(xf, params["lateral_w"][idx], params["lateral_b"][idx])
        cur = cur.reshape(Bx * Tx, H, W, d)             # channels-last
        top = memory_features[-1]
        top_cl = top.transpose(0, 2, 3, 4, 1).reshape(B * T, top.shape[3], top.shape[4], d)
        # TODO(synk): bilinear resize (align_corners=False) done with jax.image.resize glue.
        up = jax.image.resize(top_cl, (B * T, H, W, d), method="bilinear")
        y = conv3x3_relu(cur + up, params["output_w"][idx], params["output_b"][idx])
        memory_features.append(y.reshape(B, T, H, W, d).transpose(0, 4, 1, 2, 3))

    assert len(memory_features) == len(names_sorted)
    ret = {}
    for key_name, feat in zip(names_sorted, memory_features[::-1]):
        ret[key_name] = feat
    return ret, all_masks


# ----------------------------------------------------------------------------
# Deterministic parameter initialization (MXU weights stored bf16 once)
# ----------------------------------------------------------------------------
def init_params(key, cfg, multiscale_shapes):
    d = cfg["d_model"]
    lc = cfg["layer_configs"]
    qs = lc["qs_configs"]
    Nq, S, R = qs["n_scan_queries"], qs["d_state"], qs["dt_rank"]
    kconv, kc1 = qs["value_d_conv"], qs["d_conv"]
    dff = qs["attn"]["dim_feedforward"]
    encoded = sorted(cfg["encoded_scales"], key=lambda k: multiscale_shapes[k].spatial_stride)
    names_sorted = sorted(multiscale_shapes, key=lambda k: multiscale_shapes[k].spatial_stride)
    num_fpn = int(np.log2(multiscale_shapes[encoded[0]].spatial_stride)
                  - np.log2(multiscale_shapes[names_sorted[0]].spatial_stride))

    keys = iter(jax.random.split(key, 256))

    def rn(shape, scale=0.02):
        return scale * jax.random.normal(next(keys), shape, jnp.float32)

    def rnb(shape, scale=0.02):       # MXU weights: pre-cast to bf16 once
        return rn(shape, scale).astype(jnp.bfloat16)

    p = {}
    for name in encoded:
        cin = multiscale_shapes[name].dim
        p[f"proj_w_{name}"] = rnb((cin, d))
        p[f"proj_b_{name}"] = jnp.zeros((d,), jnp.float32)
    p["level_embed"] = rn((len(encoded), d))
    p["scan_queries"] = rn((Nq, d))
    p["scan_poses"] = rn((Nq, d))

    def ffn_params():
        return {"w1": rnb((d, dff)), "b1": jnp.zeros((dff,), jnp.float32),
                "w2": rnb((dff, d)), "b2": jnp.zeros((d,), jnp.float32),
                "ng": jnp.ones((d,), jnp.float32), "nb": jnp.zeros((d,), jnp.float32)}

    layers = []
    for _ in range(cfg["nlayers"]):
        lp = {
            "query_norm_g": jnp.ones((d,), jnp.float32),
            "query_norm_b": jnp.zeros((d,), jnp.float32),
            "value_proj_w": rn((d, kconv ** 3)),
            "value_proj_b": jnp.zeros((d,), jnp.float32),
            "s6_conv_w": rn((d, kc1)),
            "s6_conv_b": jnp.zeros((d,), jnp.float32),
            "s6_xproj_w": rnb((d, R + 2 * S)),
            "s6_dtproj_w": rnb((R, d)),
            "s6_dtproj_b": jnp.zeros((d,), jnp.float32),
            "s6_A_log": jnp.log(jnp.broadcast_to(
                jnp.arange(1, S + 1, dtype=jnp.float32)[None, :], (d, S))),
            "s6_D": jnp.ones((d,), jnp.float32),
            "norm1_g": jnp.ones((d,), jnp.float32),
            "norm1_b": jnp.zeros((d,), jnp.float32),
            "feat_ffn": ffn_params(),
            "attn": {"in_w": rnb((d, 3 * d)), "in_b": jnp.zeros((3 * d,), jnp.float32),
                     "out_w": rnb((d, d)), "out_b": jnp.zeros((d,), jnp.float32),
                     "ng": jnp.ones((d,), jnp.float32), "nb": jnp.zeros((d,), jnp.float32)},
            "query_ffn": ffn_params(),
        }
        layers.append(lp)
    p["layers"] = layers

    p["lateral_w"], p["lateral_b"], p["output_w"], p["output_b"] = [], [], [], []
    for name in names_sorted[:num_fpn][::-1]:
        cin = multiscale_shapes[name].dim
        p["lateral_w"].append(rnb((cin, d)))
        p["lateral_b"].append(jnp.zeros((d,), jnp.float32))
        p["output_w"].append(rnb((9 * d, d)))
        p["output_b"].append(jnp.zeros((d,), jnp.float32))
    return p


# ----------------------------------------------------------------------------
# Main
# ----------------------------------------------------------------------------
if __name__ == "__main__":
    B, T = 1, 2
    multiscale_shapes = {
        "res2": ScaleShape(dim=8, spatial_stride=4),
        "res3": ScaleShape(dim=16, spatial_stride=8),
        "res4": ScaleShape(dim=24, spatial_stride=16),
        "res5": ScaleShape(dim=32, spatial_stride=32),
    }
    spatial = {"res2": (16, 16), "res3": (8, 8), "res4": (4, 4), "res5": (2, 2)}

    configs = {
        "d_model": 32,
        "fpn_norm": "",
        "nlayers": 1,
        "encoded_scales": ["res3", "res4", "res5"],
        "layer_configs": {
            "dropout": 0.0,
            "dim_ff": 64,
            "activation": "relu",
            "qs_configs": {
                "scan_topk": 0.25, "topk_sorted": True, "value_d_conv": 3,
                "d_state": 8, "dt_rank": 4, "d_conv": 3, "d_conv_bias": True,
                "n_scan_queries": 8,
                "attn": {"dim_feedforward": 64, "dropout": 0.0,
                         "activation": "relu", "nheads": 4},
            },
        },
    }

    key = jax.random.PRNGKey(0)
    data_keys = jax.random.split(key, len(multiscale_shapes))
    multiscales = {
        name: jax.random.normal(
            k, (B, multiscale_shapes[name].dim, T, *spatial[name]), jnp.float32)
        for name, k in zip(multiscale_shapes, data_keys)
    }

    params = init_params(jax.random.PRNGKey(42), configs, multiscale_shapes)

    ret, query_masks = model_forward(multiscales, params, configs, multiscale_shapes)
    (ret, query_masks) = jax.block_until_ready((ret, query_masks))

    # sanity: finite outputs, expected shapes
    for name in multiscale_shapes:
        h, w = spatial[name]
        assert ret[name].shape == (B, configs["d_model"], T, h, w)
        assert bool(jnp.all(jnp.isfinite(ret[name])))
    assert len(query_masks) == configs["nlayers"]
    assert bool(jnp.all(jnp.isfinite(query_masks[0][0])))

    print("KERNEL_OK")
</pallas_src>

<mosaic_0001>
module attributes {stable_mosaic.version = 11 : i64} {
  func.func @_matmul_kernel(%arg0: i32, %arg1: i32, %arg2: memref<128x16xbf16, #tpu.memory_space<vmem>>, %arg3: memref<16x32xbf16, #tpu.memory_space<vmem>>, %arg4: memref<1x32xf32, #tpu.memory_space<vmem>>, %arg5: memref<128x32xf32, #tpu.memory_space<vmem>>, %arg6: memref<128x32xf32, #tpu.memory_space<vmem>>) attributes {dimension_semantics = [#tpu.dimension_semantics<parallel>, #tpu.dimension_semantics<arbitrary>], iteration_bounds = array<i64: 1, 1>, scalar_prefetch = 0 : i64, scratch_operands = 1 : i64, tpu.core_type = #tpu.core_type<tc>, window_params = [{transform_indices = @transform_0, window_bounds = array<i64: 128, 16>}, {transform_indices = @transform_1, window_bounds = array<i64: 16, 32>}, {pipeline_mode = #tpu.pipeline_mode<synchronous>, transform_indices = @transform_2, window_bounds = array<i64: 1, 32>}, {transform_indices = @transform_3, window_bounds = array<i64: 128, 32>}]} {
    %c0_i32 = arith.constant 0 : i32
    %0 = arith.cmpi eq, %arg1, %c0_i32 : i32
    %1 = arith.extui %0 : i1 to i32
    %c0_i32_0 = arith.constant 0 : i32
    %2 = arith.cmpi ne, %1, %c0_i32_0 : i32
    scf.if %2 {
      %cst_10 = arith.constant 0.000000e+00 : f32
      %12 = vector.broadcast %cst_10 : f32 to vector<128x32xf32>
      %c0_11 = arith.constant 0 : index
      %c0_12 = arith.constant 0 : index
      %13 = vector.load %arg6[%c0_11, %c0_12] : memref<128x32xf32, #tpu.memory_space<vmem>>, vector<128x32xf32>
      tpu.vector_store %arg6[%c0_11, %c0_12], %12 {strides = array<i32>} : memref<128x32xf32, #tpu.memory_space<vmem>>, vector<128x32xf32>,
    } else {
    }
    %c0 = arith.constant 0 : index
    %c0_1 = arith.constant 0 : index
    %3 = vector.load %arg6[%c0, %c0_1] : memref<128x32xf32, #tpu.memory_space<vmem>>, vector<128x32xf32>
    %c0_2 = arith.constant 0 : index
    %c0_3 = arith.constant 0 : index
    %4 = vector.load %arg2[%c0_2, %c0_3] : memref<128x16xbf16, #tpu.memory_space<vmem>>, vector<128x16xbf16>
    %c0_4 = arith.constant 0 : index
    %c0_5 = arith.constant 0 : index
    %5 = vector.load %arg3[%c0_4, %c0_5] : memref<16x32xbf16, #tpu.memory_space<vmem>>, vector<16x32xbf16>
    %cst = arith.constant dense<0.000000e+00> : vector<128x32xf32>
    %6 = tpu.matmul %4, %5, %cst {dimension_numbers = #tpu.dot_dimension_numbers<[1], [0], [0], [1], [0, 0, 1, 1], [], []>} : vector<128x16xbf16>, vector<16x32xbf16>, vector<128x32xf32> -> vector<128x32xf32>
    %7 = arith.addf %3, %6 : vector<128x32xf32>
    %c0_6 = arith.constant 0 : index
    %c0_7 = arith.constant 0 : index
    %8 = vector.load %arg6[%c0_6, %c0_7] : memref<128x32xf32, #tpu.memory_space<vmem>>, vector<128x32xf32>
    tpu.vector_store %arg6[%c0_6, %c0_7], %7 {strides = array<i32>} : memref<128x32xf32, #tpu.memory_space<vmem>>, vector<128x32xf32>,
    %c0_i32_8 = arith.constant 0 : i32
    %9 = arith.cmpi eq, %arg1, %c0_i32_8 : i32
    %10 = arith.extui %9 : i1 to i32
    %c0_i32_9 = arith.constant 0 : i32
    %11 = arith.cmpi ne, %10, %c0_i32_9 : i32
    scf.if %11 {
      %c0_10 = arith.constant 0 : index
      %c0_11 = arith.constant 0 : index
      %12 = vector.load %arg6[%c0_10, %c0_11] : memref<128x32xf32, #tpu.memory_space<vmem>>, vector<128x32xf32>
      %c0_12 = arith.constant 0 : index
      %c0_13 = arith.constant 0 : index
      %13 = vector.load %arg4[%c0_12, %c0_13] : memref<1x32xf32, #tpu.memory_space<vmem>>, vector<1x32xf32>
      %14 = vector.broadcast %13 : vector<1x32xf32> to vector<128x32xf32>
      %15 = arith.addf %12, %14 : vector<128x32xf32>
      %c0_14 = arith.constant 0 : index
      %c0_15 = arith.constant 0 : index
      %16 = vector.load %arg5[%c0_14, %c0_15] : memref<128x32xf32, #tpu.memory_space<vmem>>, vector<128x32xf32>
      tpu.vector_store %arg5[%c0_14, %c0_15], %15 {strides = array<i32>} : memref<128x32xf32, #tpu.memory_space<vmem>>, vector<128x32xf32>,
    } else {
    }
    return
  }
  func.func @transform_0(%arg0: i32, %arg1: i32) -> (i32, i32) {
    %c0_i32 = arith.constant 0 : i32
    return %arg0, %arg1 : i32, i32
  }
  func.func @transform_1(%arg0: i32, %arg1: i32) -> (i32, i32) {
    %c0_i32 = arith.constant 0 : i32
    %c0_i32_0 = arith.constant 0 : i32
    return %arg1, %c0_i32 : i32, i32
  }
  func.func @transform_2(%arg0: i32, %arg1: i32) -> (i32, i32) {
    %c0_i32 = arith.constant 0 : i32
    %c0_i32_0 = arith.constant 0 : i32
    %c0_i32_1 = arith.constant 0 : i32
    return %c0_i32, %c0_i32_0 : i32, i32
  }
  func.func @transform_3(%arg0: i32, %arg1: i32) -> (i32, i32) {
    %c0_i32 = arith.constant 0 : i32
    %c0_i32_0 = arith.constant 0 : i32
    return %arg0, %c0_i32 : i32, i32
  }
}

</mosaic_0001>

<llo_original>
// kernel: tpu_custom_call.1
$region0: #{tpu_custom_call.1}
  #allocation0 [shape = 'u32[]', space=smem, size = 0x4, offset = 0x4, fixed_abs, tag = 'smem constant byte address 0x4 - core index']
  #allocation1 [shape = 'u32[144,128]{1,0:T(1,128)}', space=vmem, size = 0x12000, scoped, tag = 'internal scratch']
  #allocation2 [shape = 'f32[128,32]{1,0:T(8,128)}', space=vmem, size = 0x10000, scoped, tag = 'scratch operand']
  %s0 = inlined_call_operand.vmem [shape: bf16[128,16], index: 0, kind: input, shape index: {}]
  %s1 = inlined_call_operand.vmem [shape: bf16[16,32], index: 1, kind: input, shape index: {}]
  %s2 = inlined_call_operand.vmem [shape: f32[1,32], index: 2, kind: input, shape index: {}]
  %s3 = inlined_call_operand.vmem [shape: f32[128,32], index: 3, kind: output, shape index: {}]
  %s4 = sld [smem:[#allocation0]]
  $region30: #{tpu_custom_call.1} parent=0
    _
  %s6 = ssub.s32 1, %s4
  %s7 = scalar_select 0, %s6, %s4
  // Predicated region
  $region2: #{tpu_custom_call.1} parent=0 // pred_check
    _
  $region3: #{tpu_custom_call.1} parent=0 // pred_check_branch
    %9 = sbr.rel (0) target = $region5
  $region4: #{tpu_custom_call.1} parent=0 // pred_region
    _
  $region5: #{tpu_custom_call.1} parent=0 // pred_fallthru
    _
  // Predicated region
  $region6: #{tpu_custom_call.1} parent=0 // pred_check
    _
  $region7: #{tpu_custom_call.1} parent=0 // pred_check_branch
    %11 = sbr.rel (0) target = $region9
  $region8: #{tpu_custom_call.1} parent=0 // pred_region
    _
  $region9: #{tpu_custom_call.1} parent=0 // pred_fallthru
    _
  // Predicated region
  $region10: #{tpu_custom_call.1} parent=0 // pred_check
    _
  $region11: #{tpu_custom_call.1} parent=0 // pred_check_branch
    %13 = sbr.rel (0) target = $region13
  $region12: #{tpu_custom_call.1} parent=0 // pred_region
    _
  $region13: #{tpu_custom_call.1} parent=0 // pred_fallthru
    _
  %p15 = scmp.eq.s32.totalorder 0, 0
  // Predicated region
  $region14: #{tpu_custom_call.1} parent=0 // pred_check
    %p16 = pneg %p15
  $region15: #{tpu_custom_call.1} parent=0 // pred_check_branch
    %18 = sbr.rel (%p16) target = $region17
  $region16: #{tpu_custom_call.1} parent=0 // pred_region
    %vm19 = vcmask 261120
    %20 = vst.msk [vmem:[#allocation2] sm:$0xff] %vm19, 0.0
    %21 = vst.msk [vmem:[#allocation2 + $0x8] sm:$0xff] %vm19, 0.0
    %22 = vst.msk [vmem:[#allocation2 + $0x10] sm:$0xff] %vm19, 0.0
    %23 = vst.msk [vmem:[#allocation2 + $0x18] sm:$0xff] %vm19, 0.0
    %24 = vst.msk [vmem:[#allocation2 + $0x20] sm:$0xff] %vm19, 0.0
    %25 = vst.msk [vmem:[#allocation2 + $0x28] sm:$0xff] %vm19, 0.0
    %26 = vst.msk [vmem:[#allocation2 + $0x30] sm:$0xff] %vm19, 0.0
    %27 = vst.msk [vmem:[#allocation2 + $0x38] sm:$0xff] %vm19, 0.0
    %28 = vst.msk [vmem:[#allocation2 + $0x40] sm:$0xff] %vm19, 0.0
    %29 = vst.msk [vmem:[#allocation2 + $0x48] sm:$0xff] %vm19, 0.0
    %30 = vst.msk [vmem:[#allocation2 + $0x50] sm:$0xff] %vm19, 0.0
    %31 = vst.msk [vmem:[#allocation2 + $0x58] sm:$0xff] %vm19, 0.0
    %32 = vst.msk [vmem:[#allocation2 + $0x60] sm:$0xff] %vm19, 0.0
    %33 = vst.msk [vmem:[#allocation2 + $0x68] sm:$0xff] %vm19, 0.0
    %34 = vst.msk [vmem:[#allocation2 + $0x70] sm:$0xff] %vm19, 0.0
    %35 = vst.msk [vmem:[#allocation2 + $0x78] sm:$0xff] %vm19, 0.0
  $region17: #{tpu_custom_call.1} parent=0 // pred_fallthru
    _
  %v36 = vld [vmem:[#allocation2] sm:$0xff]
  %v37 = vld [vmem:[#allocation2 + $0x8] sm:$0xff]
  %v38 = vld [vmem:[#allocation2 + $0x10] sm:$0xff]
  %v39 = vld [vmem:[#allocation2 + $0x18] sm:$0xff]
  %v40 = vld [vmem:[#allocation2 + $0x20] sm:$0xff]
  %v41 = vld [vmem:[#allocation2 + $0x28] sm:$0xff]
  %v42 = vld [vmem:[#allocation2 + $0x30] sm:$0xff]
  %v43 = vld [vmem:[#allocation2 + $0x38] sm:$0xff]
  %v44 = vld [vmem:[#allocation2 + $0x40] sm:$0xff]
  %v45 = vld [vmem:[#allocation2 + $0x48] sm:$0xff]
  %v46 = vld [vmem:[#allocation2 + $0x50] sm:$0xff]
  %v47 = vld [vmem:[#allocation2 + $0x58] sm:$0xff]
  %v48 = vld [vmem:[#allocation2 + $0x60] sm:$0xff]
  %v49 = vld [vmem:[#allocation2 + $0x68] sm:$0xff]
  %v50 = vld [vmem:[#allocation2 + $0x70] sm:$0xff]
  %v51 = vld [vmem:[#allocation2 + $0x78] sm:$0xff]
  %v52 = vld [vmem:[%s0] sm:$0xf]
  %v53 = vld [vmem:[%s0 + $0x4] sm:$0xf]
  %v54 = vld [vmem:[%s0 + $0x8] sm:$0xf]
  %v55 = vld [vmem:[%s0 + $0xc] sm:$0xf]
  %v56 = vld [vmem:[%s0 + $0x10] sm:$0xf]
  %v57 = vld [vmem:[%s0 + $0x14] sm:$0xf]
  %v58 = vld [vmem:[%s0 + $0x18] sm:$0xf]
  %v59 = vld [vmem:[%s0 + $0x1c] sm:$0xf]
  %v60 = vld [vmem:[%s0 + $0x20] sm:$0xf]
  %v61 = vld [vmem:[%s0 + $0x24] sm:$0xf]
  %v62 = vld [vmem:[%s0 + $0x28] sm:$0xf]
  %v63 = vld [vmem:[%s0 + $0x2c] sm:$0xf]
  %v64 = vld [vmem:[%s0 + $0x30] sm:$0xf]
  %v65 = vld [vmem:[%s0 + $0x34] sm:$0xf]
  %v66 = vld [vmem:[%s0 + $0x38] sm:$0xf]
  %v67 = vld [vmem:[%s0 + $0x3c] sm:$0xf]
  %v68 = vld [vmem:[%s1] sm:$0xf]
  %v69 = vld [vmem:[%s1 + $0x4] sm:$0xf]
  %v86 = vunpack.c.l.b16 %v52
  %v87 = vunpack.c.l.b16 %v53
  %v88 = vunpack.c.l.b16 %v54
  %v89 = vunpack.c.l.b16 %v55
  %v90 = vunpack.c.l.b16 %v56
  %v91 = vunpack.c.l.b16 %v57
  %v92 = vunpack.c.l.b16 %v58
  %v93 = vunpack.c.l.b16 %v59
  %v94 = vunpack.c.l.b16 %v60
  %v95 = vunpack.c.l.b16 %v61
  %v96 = vunpack.c.l.b16 %v62
  %v97 = vunpack.c.l.b16 %v63
  %v98 = vunpack.c.l.b16 %v64
  %v99 = vunpack.c.l.b16 %v65
  %v100 = vunpack.c.l.b16 %v66
  %v101 = vunpack.c.l.b16 %v67
  %v102 = vpack.c.b16 %v87, %v86
  %v103 = vpack.c.b16 %v89, %v88
  %v104 = vpack.c.b16 %v91, %v90
  %v105 = vpack.c.b16 %v93, %v92
  %v106 = vpack.c.b16 %v95, %v94
  %v107 = vpack.c.b16 %v97, %v96
  %v108 = vpack.c.b16 %v99, %v98
  %v109 = vpack.c.b16 %v101, %v100
  %v112 = vunpack.c.l.b16 %v68
  %v113 = vunpack.c.l.b16 %v69
  %v114 = vpack.c.b16 %v113, %v112
  %vm116 = vcmask 130048
  %v118 = vsel %vm116, %v102, 0
  %v121 = vsel %vm116, %v103, 0
  %v124 = vsel %vm116, %v104, 0
  %v127 = vsel %vm116, %v105, 0
  %v130 = vsel %vm116, %v106, 0
  %v133 = vsel %vm116, %v107, 0
  %v136 = vsel %vm116, %v108, 0
  %v139 = vsel %vm116, %v109, 0
  %141 = vmatprep.subr.bf16.mxu0 0
  %142 = vmatpush1.bf16.msra.mxu0 %v114
  %143 = vmatprep.subr.bf16.mxu0 0
  %144 = vmatpush1.bf16.msra.mxu0 0
  %145 = vmatprep.subr.bf16.mxu0 0
  %146 = vmatpush1.bf16.msra.mxu0 0
  %147 = vmatprep.subr.bf16.mxu0 0
  %148 = vmatpush1.bf16.msra.mxu0 0
  %149 = vmatprep.subr.bf16.mxu0 0
  %150 = vmatpush1.bf16.msra.mxu0 0
  %151 = vmatprep.subr.bf16.mxu0 0
  %152 = vmatpush1.bf16.msra.mxu0 0
  %153 = vmatprep.subr.bf16.mxu0 0
  %154 = vmatpush1.bf16.msra.mxu0 0
  %155 = vmatprep.subr.bf16.mxu0 0
  %156 = vmatpush1.bf16.msra.mxu0 0
  %157 = vmatprep.subr.bf16.mxu0 0
  %158 = vmatpush1.bf16.msra.mxu0 0
  %159 = vmatprep.subr.bf16.mxu0 0
  %160 = vmatpush1.bf16.msra.mxu0 0
  %161 = vmatprep.subr.bf16.mxu0 0
  %162 = vmatpush1.bf16.msra.mxu0 0
  %163 = vmatprep.subr.bf16.mxu0 0
  %164 = vmatpush1.bf16.msra.mxu0 0
  %165 = vmatprep.subr.bf16.mxu0 0
  %166 = vmatpush1.bf16.msra.mxu0 0
  %167 = vmatprep.subr.bf16.mxu0 0
  %168 = vmatpush1.bf16.msra.mxu0 0
  %169 = vmatprep.subr.bf16.mxu0 0
  %170 = vmatpush1.bf16.msra.mxu0 0
  %171 = vmatprep.subr.bf16.mxu0 0
  %172 = vmatpush1.bf16.msra.mxu0 0
  %173 = vmatprep.mubr.bf16.mxu0 0
  %174 = vmatmul.mubr.bf16.gmra.mrb[0].mxu0 %v118
  %v175 = vpop.f32.mrb[0].mxu0
  %v176 = vadd.f32 0.0, %v175
  %v177 = vpop.f32.mrb[0].mxu0
  %v178 = vpop.f32.mrb[0].mxu0
  %v179 = vadd.f32 0.0, %v178
  %v180 = vpop.f32.mrb[0].mxu0
  %181 = vmatprep.mubr.bf16.mxu0 0
  %182 = vmatmul.mubr.bf16.gmra.mrb[0].mxu0 %v121
  %v183 = vpop.f32.mrb[0].mxu0
  %v184 = vadd.f32 0.0, %v183
  %v185 = vpop.f32.mrb[0].mxu0
  %v186 = vpop.f32.mrb[0].mxu0
  %v187 = vadd.f32 0.0, %v186
  %v188 = vpop.f32.mrb[0].mxu0
  %189 = vmatprep.mubr.bf16.mxu0 0
  %190 = vmatmul.mubr.bf16.gmra.mrb[0].mxu0 %v124
  %v191 = vpop.f32.mrb[0].mxu0
  %v192 = vadd.f32 0.0, %v191
  %v193 = vpop.f32.mrb[0].mxu0
  %v194 = vpop.f32.mrb[0].mxu0
  %v195 = vadd.f32 0.0, %v194
  %v196 = vpop.f32.mrb[0].mxu0
  %197 = vmatprep.mubr.bf16.mxu0 0
  %198 = vmatmul.mubr.bf16.gmra.mrb[0].mxu0 %v127
  %v199 = vpop.f32.mrb[0].mxu0
  %v200 = vadd.f32 0.0, %v199
  %v201 = vpop.f32.mrb[0].mxu0
  %v202 = vpop.f32.mrb[0].mxu0
  %v203 = vadd.f32 0.0, %v202
  %v204 = vpop.f32.mrb[0].mxu0
  %205 = vmatprep.mubr.bf16.mxu0 0
  %206 = vmatmul.mubr.bf16.gmra.mrb[0].mxu0 %v130
  %v207 = vpop.f32.mrb[0].mxu0
  %v208 = vadd.f32 0.0, %v207
  %v209 = vpop.f32.mrb[0].mxu0
  %v210 = vpop.f32.mrb[0].mxu0
  %v211 = vadd.f32 0.0, %v210
  %v212 = vpop.f32.mrb[0].mxu0
  %213 = vmatprep.mubr.bf16.mxu0 0
  %214 = vmatmul.mubr.bf16.gmra.mrb[0].mxu0 %v133
  %v215 = vpop.f32.mrb[0].mxu0
  %v216 = vadd.f32 0.0, %v215
  %v217 = vpop.f32.mrb[0].mxu0
  %v218 = vpop.f32.mrb[0].mxu0
  %v219 = vadd.f32 0.0, %v218
  %v220 = vpop.f32.mrb[0].mxu0
  %221 = vmatprep.mubr.bf16.mxu0 0
  %222 = vmatmul.mubr.bf16.gmra.mrb[0].mxu0 %v136
  %v223 = vpop.f32.mrb[0].mxu0
  %v224 = vadd.f32 0.0, %v223
  %v225 = vpop.f32.mrb[0].mxu0
  %v226 = vpop.f32.mrb[0].mxu0
  %v227 = vadd.f32 0.0, %v226
  %v228 = vpop.f32.mrb[0].mxu0
  %229 = vmatprep.mubr.bf16.mxu0 0
  %230 = vmatmul.mubr.bf16.gmra.mrb[0].mxu0 %v139
  %v231 = vpop.f32.mrb[0].mxu0
  %v232 = vadd.f32 0.0, %v231
  %v233 = vpop.f32.mrb[0].mxu0
  %v234 = vpop.f32.mrb[0].mxu0
  %v235 = vadd.f32 0.0, %v234
  %v236 = vpop.f32.mrb[0].mxu0
  %237 = vdwg.mxu0
  %v238 = vadd.f32 %v36, %v176
  %v239 = vadd.f32 %v37, %v179
  %v240 = vadd.f32 %v38, %v184
  %v241 = vadd.f32 %v39, %v187
  %v242 = vadd.f32 %v40, %v192
  %v243 = vadd.f32 %v41, %v195
  %v244 = vadd.f32 %v42, %v200
  %v245 = vadd.f32 %v43, %v203
  %v246 = vadd.f32 %v44, %v208
  %v247 = vadd.f32 %v45, %v211
  %v248 = vadd.f32 %v46, %v216
  %v249 = vadd.f32 %v47, %v219
  %v250 = vadd.f32 %v48, %v224
  %v251 = vadd.f32 %v49, %v227
  %v252 = vadd.f32 %v50, %v232
  %v253 = vadd.f32 %v51, %v235
  %vm254 = vcmask 261120
  %255 = vst.msk [vmem:[#allocation2] sm:$0xff] %vm254, %v238
  %256 = vst.msk [vmem:[#allocation2 + $0x8] sm:$0xff] %vm254, %v239
  %257 = vst.msk [vmem:[#allocation2 + $0x10] sm:$0xff] %vm254, %v240
  %258 = vst.msk [vmem:[#allocation2 + $0x18] sm:$0xff] %vm254, %v241
  %259 = vst.msk [vmem:[#allocation2 + $0x20] sm:$0xff] %vm254, %v242
  %260 = vst.msk [vmem:[#allocation2 + $0x28] sm:$0xff] %vm254, %v243
  %261 = vst.msk [vmem:[#allocation2 + $0x30] sm:$0xff] %vm254, %v244
  %262 = vst.msk [vmem:[#allocation2 + $0x38] sm:$0xff] %vm254, %v245
  %263 = vst.msk [vmem:[#allocation2 + $0x40] sm:$0xff] %vm254, %v246
  %264 = vst.msk [vmem:[#allocation2 + $0x48] sm:$0xff] %vm254, %v247
  %265 = vst.msk [vmem:[#allocation2 + $0x50] sm:$0xff] %vm254, %v248
  %266 = vst.msk [vmem:[#allocation2 + $0x58] sm:$0xff] %vm254, %v249
  %267 = vst.msk [vmem:[#allocation2 + $0x60] sm:$0xff] %vm254, %v250
  %268 = vst.msk [vmem:[#allocation2 + $0x68] sm:$0xff] %vm254, %v251
  %269 = vst.msk [vmem:[#allocation2 + $0x70] sm:$0xff] %vm254, %v252
  %270 = vst.msk [vmem:[#allocation2 + $0x78] sm:$0xff] %vm254, %v253
  // Predicated region
  $region18: #{tpu_custom_call.1} parent=0 // pred_check
    %p271 = pneg %p15
  $region19: #{tpu_custom_call.1} parent=0 // pred_check_branch
    %273 = sbr.rel (%p271) target = $region21
  $region20: #{tpu_custom_call.1} parent=0 // pred_region
    %v274 = vld [vmem:[#allocation2] sm:$0xff]
    %v275 = vld [vmem:[#allocation2 + $0x8] sm:$0xff]
    %v276 = vld [vmem:[#allocation2 + $0x10] sm:$0xff]
    %v277 = vld [vmem:[#allocation2 + $0x18] sm:$0xff]
    %v278 = vld [vmem:[#allocation2 + $0x20] sm:$0xff]
    %v279 = vld [vmem:[#allocation2 + $0x28] sm:$0xff]
    %v280 = vld [vmem:[#allocation2 + $0x30] sm:$0xff]
    %v281 = vld [vmem:[#allocation2 + $0x38] sm:$0xff]
    %v282 = vld [vmem:[#allocation2 + $0x40] sm:$0xff]
    %v283 = vld [vmem:[#allocation2 + $0x48] sm:$0xff]
    %v284 = vld [vmem:[#allocation2 + $0x50] sm:$0xff]
    %v285 = vld [vmem:[#allocation2 + $0x58] sm:$0xff]
    %v286 = vld [vmem:[#allocation2 + $0x60] sm:$0xff]
    %v287 = vld [vmem:[#allocation2 + $0x68] sm:$0xff]
    %v288 = vld [vmem:[#allocation2 + $0x70] sm:$0xff]
    %v289 = vld [vmem:[#allocation2 + $0x78] sm:$0xff]
    %v290 = vld [vmem:[%s2] sm:$0x1]
    %v292 = vlaneseq
    %v293 = vshrl.u32 %v292, 7
    %v294 = vsub.s32 0, %v293
    %v295 = vrot.slane %v290, %v294
    %v297 = vadd.f32 %v274, %v295
    %v298 = vadd.f32 %v275, %v295
    %v299 = vadd.f32 %v276, %v295
    %v300 = vadd.f32 %v277, %v295
    %v301 = vadd.f32 %v278, %v295
    %v302 = vadd.f32 %v279, %v295
    %v303 = vadd.f32 %v280, %v295
    %v304 = vadd.f32 %v281, %v295
    %v305 = vadd.f32 %v282, %v295
    %v306 = vadd.f32 %v283, %v295
    %v307 = vadd.f32 %v284, %v295
    %v308 = vadd.f32 %v285, %v295
    %v309 = vadd.f32 %v286, %v295
    %v310 = vadd.f32 %v287, %v295
    %v311 = vadd.f32 %v288, %v295
    %v312 = vadd.f32 %v289, %v295
    %313 = vst.msk [vmem:[%s3] sm:$0xff] %vm254, %v297
    %314 = vst.msk [vmem:[%s3 + $0x8] sm:$0xff] %vm254, %v298
    %315 = vst.msk [vmem:[%s3 + $0x10] sm:$0xff] %vm254, %v299
    %316 = vst.msk [vmem:[%s3 + $0x18] sm:$0xff] %vm254, %v300
    %317 = vst.msk [vmem:[%s3 + $0x20] sm:$0xff] %vm254, %v301
    %318 = vst.msk [vmem:[%s3 + $0x28] sm:$0xff] %vm254, %v302
    %319 = vst.msk [vmem:[%s3 + $0x30] sm:$0xff] %vm254, %v303
    %320 = vst.msk [vmem:[%s3 + $0x38] sm:$0xff] %vm254, %v304
    %321 = vst.msk [vmem:[%s3 + $0x40] sm:$0xff] %vm254, %v305
    %322 = vst.msk [vmem:[%s3 + $0x48] sm:$0xff] %vm254, %v306
    %323 = vst.msk [vmem:[%s3 + $0x50] sm:$0xff] %vm254, %v307
    %324 = vst.msk [vmem:[%s3 + $0x58] sm:$0xff] %vm254, %v308
    %325 = vst.msk [vmem:[%s3 + $0x60] sm:$0xff] %vm254, %v309
    %326 = vst.msk [vmem:[%s3 + $0x68] sm:$0xff] %vm254, %v310
    %327 = vst.msk [vmem:[%s3 + $0x70] sm:$0xff] %vm254, %v311
    %328 = vst.msk [vmem:[%s3 + $0x78] sm:$0xff] %vm254, %v312
  $region21: #{tpu_custom_call.1} parent=0 // pred_fallthru
    _
  // Predicated region
  $region22: #{tpu_custom_call.1} parent=0 // pred_check
    _
  $region23: #{tpu_custom_call.1} parent=0 // pred_check_branch
    %330 = sbr.rel (0) target = $region25
  $region24: #{tpu_custom_call.1} parent=0 // pred_region
    _
  $region25: #{tpu_custom_call.1} parent=0 // pred_fallthru
    _
  // Predicated region
  $region26: #{tpu_custom_call.1} parent=0 // pred_check
    _
  $region27: #{tpu_custom_call.1} parent=0 // pred_check_branch
    %332 = sbr.rel (0) target = $region29
  $region28: #{tpu_custom_call.1} parent=0 // pred_region
    _
  $region29: #{tpu_custom_call.1} parent=0 // pred_fallthru
    _

</llo_original>
